<compile_context>
chip_gen: v5e
topology: v5e:2x2
jax: 0.10.0
libtpu: 0.0.40
codegen_flags: <defaults>
</compile_context>

<pallas_src>
import functools

import jax
import jax.numpy as jnp
from jax.experimental import pallas as pl
from jax.experimental.pallas import tpu as pltpu

_EPS = 1e-12
_LANE = 128


def _saits_partial_kernel(rec_ref, xori_ref, mm_ref, im_ref,
                          adm_ref, am_ref, adi_ref, ai_ref,
                          *, rows, rt, spc, n_blocks, groups, acc_rows,
                          first_masked, any_masked):
    """Per-core partial sums of |diff|*mm, mm, |diff|*im, im over (rt,128) tiles."""
    c = pl.program_id(0)          # core slot (parallel axis)
    step = pl.program_id(1)       # sequential reduction axis
    gb = c * spc + step           # unclamped global block index

    @pl.when(step == 0)
    def _init():
        adm_ref[...] = jnp.zeros_like(adm_ref)
        am_ref[...] = jnp.zeros_like(am_ref)
        adi_ref[...] = jnp.zeros_like(adi_ref)
        ai_ref[...] = jnp.zeros_like(ai_ref)

    # In-kernel upcast (narrow dtypes stream over HBM; upcast is free VPU filler).
    rec = rec_ref[...].astype(jnp.float32)
    xori = xori_ref[...].astype(jnp.float32)
    mm = mm_ref[...].astype(jnp.float32)
    im = im_ref[...].astype(jnp.float32)
    abs_diff = jnp.abs(rec - xori)

    def tree(x):
        # Sublane tree-sum (pure vreg adds over the major axis) down to the
        # fixed (acc_rows, 128) accumulator — decoupled from row_tile.
        if groups == 1:
            return x
        return jnp.sum(x.reshape(groups, acc_rows, _LANE), axis=0)

    def accumulate(ad, mmv, imv):
        adm_ref[...] += tree(ad * mmv)
        am_ref[...] += tree(mmv)
        adi_ref[...] += tree(ad * imv)
        ai_ref[...] += tree(imv)

    if any_masked:
        # Fast (unmasked) path for every full block.
        @pl.when(gb < first_masked)
        def _fast():
            accumulate(abs_diff, mm, im)

        # Masked path only for the ragged last block and clamped duplicate
        # blocks of the trailing core (zeroes possibly-garbage padding rows).
        @pl.when(gb >= first_masked)
        def _masked():
            row_ids = gb * rt + jax.lax.broadcasted_iota(
                jnp.int32, (rt, _LANE), 0)
            valid = row_ids < rows
            zero = jnp.float32(0.0)
            accumulate(jnp.where(valid, abs_diff, zero),
                       jnp.where(valid, mm, zero),
                       jnp.where(valid, im, zero))
    else:
        accumulate(abs_diff, mm, im)


def _round_up(x, m):
    return ((x + m - 1) // m) * m


@functools.partial(jax.jit,
                   static_argnames=("ORT_weight", "MIT_weight", "row_tile"))
def _saits_loss_impl(reconstruction, X_ori, missing_mask, indicating_mask, *,
                     ORT_weight, MIT_weight, row_tile):
    def flat(x):
        if x.dtype == jnp.bool_:
            x = x.astype(jnp.int8)      # bool masks streamed as int8
        return x.reshape(-1)

    rec = flat(reconstruction)
    xori = flat(X_ori)
    mm = flat(missing_mask)
    im = flat(indicating_mask)

    n = rec.size
    rows = n // _LANE                   # full lane-dense rows of 128
    rem = n - rows * _LANE              # sub-128 remainder (handled in wrapper)

    num_ort = jnp.float32(0.0)
    den_ort = jnp.float32(0.0)
    num_mit = jnp.float32(0.0)
    den_mit = jnp.float32(0.0)

    if rows > 0:
        n_aligned = rows * _LANE

        def to2d(x):
            # Zero-copy reshape when aligned; prefix slice only for ragged sizes.
            if rem == 0:
                return x.reshape(rows, _LANE)
            return x[:n_aligned].reshape(rows, _LANE)

        rec2, xori2, mm2, im2 = to2d(rec), to2d(xori), to2d(mm), to2d(im)

        bytes_per_row_set = _LANE * sum(
            x.dtype.itemsize for x in (rec2, xori2, mm2, im2))

        # Tile selection: multiple of 32 (so (8/16/32,128) packed tilings all
        # apply), capped so double-buffered inputs stay around 32 MiB.
        rt = _round_up(max(32, int(row_tile)), 32)
        rt_cap = max(32, (((32 << 20) // (2 * bytes_per_row_set)) // 32) * 32)
        rt = min(rt, rt_cap)

        if rows <= rt:
            rt = rows                   # single full-array block (any row count)
            n_blocks = 1
        else:
            n_blocks = pl.cdiv(rows, rt)

        num_cores = 2 if n_blocks >= 2 else 1     # v7x: 2 TCs; harmless elsewhere
        spc = pl.cdiv(n_blocks, num_cores)        # steps per core
        ragged = (rows % rt) != 0
        first_masked = (n_blocks - 1) if ragged else n_blocks
        any_masked = first_masked < num_cores * spc

        acc_rows = 8 if rt % 8 == 0 else rt       # fixed small accumulator
        groups = rt // acc_rows

        in_spec = pl.BlockSpec(
            (rt, _LANE),
            lambda c, s: (jnp.minimum(c * spc + s, n_blocks - 1), 0))
        out_spec = pl.BlockSpec(
            (None, acc_rows, _LANE), lambda c, s: (c, 0, 0))
        out_sds = jax.ShapeDtypeStruct((num_cores, acc_rows, _LANE), jnp.float32)

        vmem_limit = int(min(max(2 * rt * bytes_per_row_set + (4 << 20),
                                 16 << 20), 48 << 20))

        kernel = functools.partial(
            _saits_partial_kernel, rows=rows, rt=rt, spc=spc,
            n_blocks=n_blocks, groups=groups, acc_rows=acc_rows,
            first_masked=first_masked, any_masked=any_masked)

        adm, am, adi, ai = pl.pallas_call(
            kernel,
            out_shape=(out_sds, out_sds, out_sds, out_sds),
            grid=(num_cores, spc),
            in_specs=[in_spec, in_spec, in_spec, in_spec],
            out_specs=(out_spec, out_spec, out_spec, out_spec),
            compiler_params=pltpu.CompilerParams(
                dimension_semantics=("parallel", "arbitrary"),
                vmem_limit_bytes=vmem_limit),
        )(rec2, xori2, mm2, im2)

        num_ort += jnp.sum(adm)
        den_ort += jnp.sum(am)
        num_mit += jnp.sum(adi)
        den_mit += jnp.sum(ai)

    if rem:
        # Tiny (<128-element) remainder done in plain JAX — avoids a full
        # pad/copy pass over all four tensors for ragged element counts.
        s = rows * _LANE
        rec_t = rec[s:].astype(jnp.float32)
        xori_t = xori[s:].astype(jnp.float32)
        mm_t = mm[s:].astype(jnp.float32)
        im_t = im[s:].astype(jnp.float32)
        ad_t = jnp.abs(rec_t - xori_t)
        num_ort += jnp.sum(ad_t * mm_t)
        den_ort += jnp.sum(mm_t)
        num_mit += jnp.sum(ad_t * im_t)
        den_mit += jnp.sum(im_t)

    ort = jnp.float32(ORT_weight) * num_ort / (den_ort + jnp.float32(_EPS))
    mit = jnp.float32(MIT_weight) * num_mit / (den_mit + jnp.float32(_EPS))
    return ort + mit, ort, mit


def saits_loss(reconstruction, X_ori, missing_mask, indicating_mask,
               ORT_weight=1.0, MIT_weight=1.0, row_tile=4096):
    """Pallas implementation of SaitsLoss.forward. Returns (loss, ORT, MIT)."""
    return _saits_loss_impl(reconstruction, X_ori, missing_mask,
                            indicating_mask,
                            ORT_weight=float(ORT_weight),
                            MIT_weight=float(MIT_weight),
                            row_tile=int(row_tile))


def _reference(reconstruction, X_ori, missing_mask, indicating_mask,
               ORT_weight, MIT_weight):
    def calc_mae(pred, target, mask):
        return jnp.sum(jnp.abs(pred - target) * mask) / (jnp.sum(mask) + _EPS)
    ort = ORT_weight * calc_mae(reconstruction, X_ori, missing_mask)
    mit = MIT_weight * calc_mae(reconstruction, X_ori, indicating_mask)
    return ort + mit, ort, mit


def _check(got, ref, rtol, atol, tag):
    for g, r in zip(got, ref):
        assert jnp.allclose(g, r, rtol=rtol, atol=atol), (tag, g, r)


if __name__ == "__main__":
    ORT_weight, MIT_weight = 1.0, 0.5

    # --- test 1: small shape consistent with the module (single-block path) ---
    k1, k2, k3, k4 = jax.random.split(jax.random.PRNGKey(0), 4)
    B, T, D = 2, 8, 32
    rec = jax.random.normal(k1, (B, T, D), jnp.float32)
    xori = jax.random.normal(k2, (B, T, D), jnp.float32)
    mmask = (jax.random.uniform(k3, (B, T, D)) > 0.3).astype(jnp.float32)
    imask = (jax.random.uniform(k4, (B, T, D)) > 0.7).astype(jnp.float32)

    out1 = saits_loss(rec, xori, mmask, imask, ORT_weight, MIT_weight)
    jax.block_until_ready(out1)
    ref1 = _reference(rec, xori, mmask, imask, ORT_weight, MIT_weight)
    _check(out1, ref1, 1e-5, 1e-6, "test1")

    # --- test 2: ragged element count + small tile -> multi-block, 2-core split,
    #     masked tail block, plain-JAX remainder ---
    k5, k6, k7, k8 = jax.random.split(jax.random.PRNGKey(1), 4)
    B2, T2, D2 = 3, 37, 40          # 4440 elements: 34 full lane-rows + 88 tail
    rec2 = jax.random.normal(k5, (B2, T2, D2), jnp.float32)
    xori2 = jax.random.normal(k6, (B2, T2, D2), jnp.float32)
    mm2 = (jax.random.uniform(k7, (B2, T2, D2)) > 0.4).astype(jnp.float32)
    im2 = (jax.random.uniform(k8, (B2, T2, D2)) > 0.6).astype(jnp.float32)

    out2 = saits_loss(rec2, xori2, mm2, im2, ORT_weight, MIT_weight, row_tile=32)
    jax.block_until_ready(out2)
    ref2 = _reference(rec2, xori2, mm2, im2, ORT_weight, MIT_weight)
    _check(out2, ref2, 1e-5, 1e-6, "test2")

    # --- test 3: narrow dtypes (bf16 data, int8 masks) + odd block count ->
    #     clamped duplicate block on the second core ---
    k9, k10, k11, k12 = jax.random.split(jax.random.PRNGKey(2), 4)
    B3, T3, D3 = 5, 13, 128         # 8320 elements = 65 lane-rows exactly
    rec3 = jax.random.normal(k9, (B3, T3, D3), jnp.float32).astype(jnp.bfloat16)
    xori3 = jax.random.normal(k10, (B3, T3, D3), jnp.float32).astype(jnp.bfloat16)
    mm3 = (jax.random.uniform(k11, (B3, T3, D3)) > 0.3).astype(jnp.int8)
    im3 = (jax.random.uniform(k12, (B3, T3, D3)) > 0.7).astype(jnp.int8)

    out3 = saits_loss(rec3, xori3, mm3, im3, ORT_weight, MIT_weight, row_tile=32)
    jax.block_until_ready(out3)
    ref3 = _reference(rec3.astype(jnp.float32), xori3.astype(jnp.float32),
                      mm3.astype(jnp.float32), im3.astype(jnp.float32),
                      ORT_weight, MIT_weight)
    _check(out3, ref3, 1e-4, 1e-5, "test3")

    print("KERNEL_OK")
</pallas_src>

<mosaic_0001>
module attributes {stable_mosaic.version = 11 : i64} {
  func.func @_saits_partial_kernel(%arg0: i32, %arg1: i32, %arg2: memref<4x128xf32, #tpu.memory_space<vmem>>, %arg3: memref<4x128xf32, #tpu.memory_space<vmem>>, %arg4: memref<4x128xf32, #tpu.memory_space<vmem>>, %arg5: memref<4x128xf32, #tpu.memory_space<vmem>>, %arg6: memref<1x4x128xf32, #tpu.memory_space<vmem>>, %arg7: memref<1x4x128xf32, #tpu.memory_space<vmem>>, %arg8: memref<1x4x128xf32, #tpu.memory_space<vmem>>, %arg9: memref<1x4x128xf32, #tpu.memory_space<vmem>>) attributes {dimension_semantics = [#tpu.dimension_semantics<parallel>, #tpu.dimension_semantics<arbitrary>], iteration_bounds = array<i64: 1, 1>, scalar_prefetch = 0 : i64, scratch_operands = 0 : i64, tpu.core_type = #tpu.core_type<tc>, window_params = [{transform_indices = @transform_0, window_bounds = array<i64: 4, 128>}, {transform_indices = @transform_1, window_bounds = array<i64: 4, 128>}, {transform_indices = @transform_2, window_bounds = array<i64: 4, 128>}, {transform_indices = @transform_3, window_bounds = array<i64: 4, 128>}, {transform_indices = @transform_4, window_bounds = array<i64: 1, 4, 128>}, {transform_indices = @transform_5, window_bounds = array<i64: 1, 4, 128>}, {transform_indices = @transform_6, window_bounds = array<i64: 1, 4, 128>}, {transform_indices = @transform_7, window_bounds = array<i64: 1, 4, 128>}]} {
    %c0_i32 = arith.constant 0 : i32
    %0 = arith.cmpi eq, %arg1, %c0_i32 : i32
    %1 = arith.extui %0 : i1 to i32
    %c0_i32_0 = arith.constant 0 : i32
    %2 = arith.cmpi ne, %1, %c0_i32_0 : i32
    scf.if %2 {
      %cst = arith.constant 0.000000e+00 : f32
      %35 = vector.broadcast %cst : f32 to vector<4x128xf32>
      %c0_32 = arith.constant 0 : index
      %c0_33 = arith.constant 0 : index
      %c0_34 = arith.constant 0 : index
      %36 = vector.load %arg6[%c0_32, %c0_33, %c0_34] : memref<1x4x128xf32, #tpu.memory_space<vmem>>, vector<1x4x128xf32>
      %37 = vector.shape_cast %36 : vector<1x4x128xf32> to vector<4x128xf32>
      %38 = vector.shape_cast %35 : vector<4x128xf32> to vector<1x4x128xf32>
      tpu.vector_store %arg6[%c0_32, %c0_33, %c0_34], %38 {strides = array<i32>} : memref<1x4x128xf32, #tpu.memory_space<vmem>>, vector<1x4x128xf32>,
      %cst_35 = arith.constant 0.000000e+00 : f32
      %39 = vector.broadcast %cst_35 : f32 to vector<4x128xf32>
      %c0_36 = arith.constant 0 : index
      %c0_37 = arith.constant 0 : index
      %c0_38 = arith.constant 0 : index
      %40 = vector.load %arg7[%c0_36, %c0_37, %c0_38] : memref<1x4x128xf32, #tpu.memory_space<vmem>>, vector<1x4x128xf32>
      %41 = vector.shape_cast %40 : vector<1x4x128xf32> to vector<4x128xf32>
      %42 = vector.shape_cast %39 : vector<4x128xf32> to vector<1x4x128xf32>
      tpu.vector_store %arg7[%c0_36, %c0_37, %c0_38], %42 {strides = array<i32>} : memref<1x4x128xf32, #tpu.memory_space<vmem>>, vector<1x4x128xf32>,
      %cst_39 = arith.constant 0.000000e+00 : f32
      %43 = vector.broadcast %cst_39 : f32 to vector<4x128xf32>
      %c0_40 = arith.constant 0 : index
      %c0_41 = arith.constant 0 : index
      %c0_42 = arith.constant 0 : index
      %44 = vector.load %arg8[%c0_40, %c0_41, %c0_42] : memref<1x4x128xf32, #tpu.memory_space<vmem>>, vector<1x4x128xf32>
      %45 = vector.shape_cast %44 : vector<1x4x128xf32> to vector<4x128xf32>
      %46 = vector.shape_cast %43 : vector<4x128xf32> to vector<1x4x128xf32>
      tpu.vector_store %arg8[%c0_40, %c0_41, %c0_42], %46 {strides = array<i32>} : memref<1x4x128xf32, #tpu.memory_space<vmem>>, vector<1x4x128xf32>,
      %cst_43 = arith.constant 0.000000e+00 : f32
      %47 = vector.broadcast %cst_43 : f32 to vector<4x128xf32>
      %c0_44 = arith.constant 0 : index
      %c0_45 = arith.constant 0 : index
      %c0_46 = arith.constant 0 : index
      %48 = vector.load %arg9[%c0_44, %c0_45, %c0_46] : memref<1x4x128xf32, #tpu.memory_space<vmem>>, vector<1x4x128xf32>
      %49 = vector.shape_cast %48 : vector<1x4x128xf32> to vector<4x128xf32>
      %50 = vector.shape_cast %47 : vector<4x128xf32> to vector<1x4x128xf32>
      tpu.vector_store %arg9[%c0_44, %c0_45, %c0_46], %50 {strides = array<i32>} : memref<1x4x128xf32, #tpu.memory_space<vmem>>, vector<1x4x128xf32>,
    } else {
    }
    %c0 = arith.constant 0 : index
    %c0_1 = arith.constant 0 : index
    %3 = vector.load %arg2[%c0, %c0_1] : memref<4x128xf32, #tpu.memory_space<vmem>>, vector<4x128xf32>
    %c0_2 = arith.constant 0 : index
    %c0_3 = arith.constant 0 : index
    %4 = vector.load %arg3[%c0_2, %c0_3] : memref<4x128xf32, #tpu.memory_space<vmem>>, vector<4x128xf32>
    %c0_4 = arith.constant 0 : index
    %c0_5 = arith.constant 0 : index
    %5 = vector.load %arg4[%c0_4, %c0_5] : memref<4x128xf32, #tpu.memory_space<vmem>>, vector<4x128xf32>
    %c0_6 = arith.constant 0 : index
    %c0_7 = arith.constant 0 : index
    %6 = vector.load %arg5[%c0_6, %c0_7] : memref<4x128xf32, #tpu.memory_space<vmem>>, vector<4x128xf32>
    %7 = arith.subf %3, %4 : vector<4x128xf32>
    %8 = math.absf %7 : vector<4x128xf32>
    %c0_8 = arith.constant 0 : index
    %c0_9 = arith.constant 0 : index
    %c0_10 = arith.constant 0 : index
    %9 = vector.load %arg6[%c0_8, %c0_9, %c0_10] : memref<1x4x128xf32, #tpu.memory_space<vmem>>, vector<1x4x128xf32>
    %10 = vector.shape_cast %9 : vector<1x4x128xf32> to vector<4x128xf32>
    %11 = arith.mulf %8, %5 : vector<4x128xf32>
    %12 = arith.addf %10, %11 : vector<4x128xf32>
    %c0_11 = arith.constant 0 : index
    %c0_12 = arith.constant 0 : index
    %c0_13 = arith.constant 0 : index
    %13 = vector.load %arg6[%c0_11, %c0_12, %c0_13] : memref<1x4x128xf32, #tpu.memory_space<vmem>>, vector<1x4x128xf32>
    %14 = vector.shape_cast %13 : vector<1x4x128xf32> to vector<4x128xf32>
    %15 = vector.shape_cast %12 : vector<4x128xf32> to vector<1x4x128xf32>
    tpu.vector_store %arg6[%c0_11, %c0_12, %c0_13], %15 {strides = array<i32>} : memref<1x4x128xf32, #tpu.memory_space<vmem>>, vector<1x4x128xf32>,
    %c0_14 = arith.constant 0 : index
    %c0_15 = arith.constant 0 : index
    %c0_16 = arith.constant 0 : index
    %16 = vector.load %arg7[%c0_14, %c0_15, %c0_16] : memref<1x4x128xf32, #tpu.memory_space<vmem>>, vector<1x4x128xf32>
    %17 = vector.shape_cast %16 : vector<1x4x128xf32> to vector<4x128xf32>
    %18 = arith.addf %17, %5 : vector<4x128xf32>
    %c0_17 = arith.constant 0 : index
    %c0_18 = arith.constant 0 : index
    %c0_19 = arith.constant 0 : index
    %19 = vector.load %arg7[%c0_17, %c0_18, %c0_19] : memref<1x4x128xf32, #tpu.memory_space<vmem>>, vector<1x4x128xf32>
    %20 = vector.shape_cast %19 : vector<1x4x128xf32> to vector<4x128xf32>
    %21 = vector.shape_cast %18 : vector<4x128xf32> to vector<1x4x128xf32>
    tpu.vector_store %arg7[%c0_17, %c0_18, %c0_19], %21 {strides = array<i32>} : memref<1x4x128xf32, #tpu.memory_space<vmem>>, vector<1x4x128xf32>,
    %c0_20 = arith.constant 0 : index
    %c0_21 = arith.constant 0 : index
    %c0_22 = arith.constant 0 : index
    %22 = vector.load %arg8[%c0_20, %c0_21, %c0_22] : memref<1x4x128xf32, #tpu.memory_space<vmem>>, vector<1x4x128xf32>
    %23 = vector.shape_cast %22 : vector<1x4x128xf32> to vector<4x128xf32>
    %24 = arith.mulf %8, %6 : vector<4x128xf32>
    %25 = arith.addf %23, %24 : vector<4x128xf32>
    %c0_23 = arith.constant 0 : index
    %c0_24 = arith.constant 0 : index
    %c0_25 = arith.constant 0 : index
    %26 = vector.load %arg8[%c0_23, %c0_24, %c0_25] : memref<1x4x128xf32, #tpu.memory_space<vmem>>, vector<1x4x128xf32>
    %27 = vector.shape_cast %26 : vector<1x4x128xf32> to vector<4x128xf32>
    %28 = vector.shape_cast %25 : vector<4x128xf32> to vector<1x4x128xf32>
    tpu.vector_store %arg8[%c0_23, %c0_24, %c0_25], %28 {strides = array<i32>} : memref<1x4x128xf32, #tpu.memory_space<vmem>>, vector<1x4x128xf32>,
    %c0_26 = arith.constant 0 : index
    %c0_27 = arith.constant 0 : index
    %c0_28 = arith.constant 0 : index
    %29 = vector.load %arg9[%c0_26, %c0_27, %c0_28] : memref<1x4x128xf32, #tpu.memory_space<vmem>>, vector<1x4x128xf32>
    %30 = vector.shape_cast %29 : vector<1x4x128xf32> to vector<4x128xf32>
    %31 = arith.addf %30, %6 : vector<4x128xf32>
    %c0_29 = arith.constant 0 : index
    %c0_30 = arith.constant 0 : index
    %c0_31 = arith.constant 0 : index
    %32 = vector.load %arg9[%c0_29, %c0_30, %c0_31] : memref<1x4x128xf32, #tpu.memory_space<vmem>>, vector<1x4x128xf32>
    %33 = vector.shape_cast %32 : vector<1x4x128xf32> to vector<4x128xf32>
    %34 = vector.shape_cast %31 : vector<4x128xf32> to vector<1x4x128xf32>
    tpu.vector_store %arg9[%c0_29, %c0_30, %c0_31], %34 {strides = array<i32>} : memref<1x4x128xf32, #tpu.memory_space<vmem>>, vector<1x4x128xf32>,
    return
  }
  func.func @transform_0(%arg0: i32, %arg1: i32) -> (i32, i32) {
    %c1_i32 = arith.constant 1 : i32
    %0 = arith.muli %arg0, %c1_i32 : i32
    %1 = arith.addi %0, %arg1 : i32
    %c0_i32 = arith.constant 0 : i32
    %2 = arith.minsi %1, %c0_i32 : i32
    %c0_i32_0 = arith.constant 0 : i32
    %c0_i32_1 = arith.constant 0 : i32
    return %2, %c0_i32_0 : i32, i32
  }
  func.func @transform_1(%arg0: i32, %arg1: i32) -> (i32, i32) {
    %c1_i32 = arith.constant 1 : i32
    %0 = arith.muli %arg0, %c1_i32 : i32
    %1 = arith.addi %0, %arg1 : i32
    %c0_i32 = arith.constant 0 : i32
    %2 = arith.minsi %1, %c0_i32 : i32
    %c0_i32_0 = arith.constant 0 : i32
    %c0_i32_1 = arith.constant 0 : i32
    return %2, %c0_i32_0 : i32, i32
  }
  func.func @transform_2(%arg0: i32, %arg1: i32) -> (i32, i32) {
    %c1_i32 = arith.constant 1 : i32
    %0 = arith.muli %arg0, %c1_i32 : i32
    %1 = arith.addi %0, %arg1 : i32
    %c0_i32 = arith.constant 0 : i32
    %2 = arith.minsi %1, %c0_i32 : i32
    %c0_i32_0 = arith.constant 0 : i32
    %c0_i32_1 = arith.constant 0 : i32
    return %2, %c0_i32_0 : i32, i32
  }
  func.func @transform_3(%arg0: i32, %arg1: i32) -> (i32, i32) {
    %c1_i32 = arith.constant 1 : i32
    %0 = arith.muli %arg0, %c1_i32 : i32
    %1 = arith.addi %0, %arg1 : i32
    %c0_i32 = arith.constant 0 : i32
    %2 = arith.minsi %1, %c0_i32 : i32
    %c0_i32_0 = arith.constant 0 : i32
    %c0_i32_1 = arith.constant 0 : i32
    return %2, %c0_i32_0 : i32, i32
  }
  func.func @transform_4(%arg0: i32, %arg1: i32) -> (i32, i32, i32) {
    %c0_i32 = arith.constant 0 : i32
    %c0_i32_0 = arith.constant 0 : i32
    %c0_i32_1 = arith.constant 0 : i32
    return %arg0, %c0_i32, %c0_i32_0 : i32, i32, i32
  }
  func.func @transform_5(%arg0: i32, %arg1: i32) -> (i32, i32, i32) {
    %c0_i32 = arith.constant 0 : i32
    %c0_i32_0 = arith.constant 0 : i32
    %c0_i32_1 = arith.constant 0 : i32
    return %arg0, %c0_i32, %c0_i32_0 : i32, i32, i32
  }
  func.func @transform_6(%arg0: i32, %arg1: i32) -> (i32, i32, i32) {
    %c0_i32 = arith.constant 0 : i32
    %c0_i32_0 = arith.constant 0 : i32
    %c0_i32_1 = arith.constant 0 : i32
    return %arg0, %c0_i32, %c0_i32_0 : i32, i32, i32
  }
  func.func @transform_7(%arg0: i32, %arg1: i32) -> (i32, i32, i32) {
    %c0_i32 = arith.constant 0 : i32
    %c0_i32_0 = arith.constant 0 : i32
    %c0_i32_1 = arith.constant 0 : i32
    return %arg0, %c0_i32, %c0_i32_0 : i32, i32, i32
  }
}

</mosaic_0001>

<llo_original>
// kernel: _saits_loss_impl.1
$region0: #{_saits_loss_impl.1}
  #allocation0 [shape = 'u32[]', space=smem, size = 0x4, offset = 0x4, fixed_abs, tag = 'smem constant byte address 0x4 - core index']
  #allocation1 [shape = 'u32[72,128]{1,0:T(1,128)}', space=vmem, size = 0x9000, scoped, tag = 'internal scratch']
  %s0 = inlined_call_operand.vmem [shape: f32[4,128], index: 0, kind: input, shape index: {}]
  %s1 = inlined_call_operand.vmem [shape: f32[4,128], index: 1, kind: input, shape index: {}]
  %s2 = inlined_call_operand.vmem [shape: f32[4,128], index: 2, kind: input, shape index: {}]
  %s3 = inlined_call_operand.vmem [shape: f32[4,128], index: 3, kind: input, shape index: {}]
  %s4 = inlined_call_operand.vmem [shape: f32[1,4,128], index: 4, kind: output, shape index: {0}]
  %s5 = inlined_call_operand.vmem [shape: f32[1,4,128], index: 5, kind: output, shape index: {1}]
  %s6 = inlined_call_operand.vmem [shape: f32[1,4,128], index: 6, kind: output, shape index: {2}]
  %s7 = inlined_call_operand.vmem [shape: f32[1,4,128], index: 7, kind: output, shape index: {3}]
  %8 = xla_tuple %s4, %s5, %s6, %s7
  %s9 = sld [smem:[#allocation0]]
  $region54: #{_saits_loss_impl.1} parent=0
    _
  %s11 = ssub.s32 1, %s9
  %s12 = scalar_select 0, %s11, %s9
  // Predicated region
  $region2: #{_saits_loss_impl.1} parent=0 // pred_check
    _
  $region3: #{_saits_loss_impl.1} parent=0 // pred_check_branch
    %14 = sbr.rel (0) target = $region5
  $region4: #{_saits_loss_impl.1} parent=0 // pred_region
    %s15 = sadd.s32 0, 0
    %p16 = scmp.lt.s32.totalorder %s15, 0
    %s17 = scalar_select %p16, %s15, 0
    %p18 = scmp.lt.s32.totalorder %s17, 0
    %s19 = scalar_select %p18, %s17, 0
    %s20 = smul.addr %s19, 4
    %s21 = scalar_lea.vmem %s0, %s20
    %s22 = sadd.s32 0, 0
    %p23 = scmp.lt.s32.totalorder %s22, 0
    %s24 = scalar_select %p23, %s22, 0
  $region5: #{_saits_loss_impl.1} parent=0 // pred_fallthru
    _
  // Predicated region
  $region6: #{_saits_loss_impl.1} parent=0 // pred_check
    _
  $region7: #{_saits_loss_impl.1} parent=0 // pred_check_branch
    %26 = sbr.rel (0) target = $region9
  $region8: #{_saits_loss_impl.1} parent=0 // pred_region
    %s27 = sadd.s32 0, 0
    %p28 = scmp.lt.s32.totalorder %s27, 0
    %s29 = scalar_select %p28, %s27, 0
    %p30 = scmp.lt.s32.totalorder %s29, 0
    %s31 = scalar_select %p30, %s29, 0
    %s32 = smul.addr %s31, 4
    %s33 = scalar_lea.vmem %s1, %s32
    %s34 = sadd.s32 0, 0
    %p35 = scmp.lt.s32.totalorder %s34, 0
    %s36 = scalar_select %p35, %s34, 0
  $region9: #{_saits_loss_impl.1} parent=0 // pred_fallthru
    _
  // Predicated region
  $region10: #{_saits_loss_impl.1} parent=0 // pred_check
    _
  $region11: #{_saits_loss_impl.1} parent=0 // pred_check_branch
    %38 = sbr.rel (0) target = $region13
  $region12: #{_saits_loss_impl.1} parent=0 // pred_region
    %s39 = sadd.s32 0, 0
    %p40 = scmp.lt.s32.totalorder %s39, 0
    %s41 = scalar_select %p40, %s39, 0
    %p42 = scmp.lt.s32.totalorder %s41, 0
    %s43 = scalar_select %p42, %s41, 0
    %s44 = smul.addr %s43, 4
    %s45 = scalar_lea.vmem %s2, %s44
    %s46 = sadd.s32 0, 0
    %p47 = scmp.lt.s32.totalorder %s46, 0
    %s48 = scalar_select %p47, %s46, 0
  $region13: #{_saits_loss_impl.1} parent=0 // pred_fallthru
    _
  // Predicated region
  $region14: #{_saits_loss_impl.1} parent=0 // pred_check
    _
  $region15: #{_saits_loss_impl.1} parent=0 // pred_check_branch
    %50 = sbr.rel (0) target = $region17
  $region16: #{_saits_loss_impl.1} parent=0 // pred_region
    %s51 = sadd.s32 0, 0
    %p52 = scmp.lt.s32.totalorder %s51, 0
    %s53 = scalar_select %p52, %s51, 0
    %p54 = scmp.lt.s32.totalorder %s53, 0
    %s55 = scalar_select %p54, %s53, 0
    %s56 = smul.addr %s55, 4
    %s57 = scalar_lea.vmem %s3, %s56
    %s58 = sadd.s32 0, 0
    %p59 = scmp.lt.s32.totalorder %s58, 0
    %s60 = scalar_select %p59, %s58, 0
  $region17: #{_saits_loss_impl.1} parent=0 // pred_fallthru
    _
  %s61 = sadd.s32 0, 0
  %p62 = scmp.lt.s32.totalorder %s61, 0
  %s63 = scalar_select %p62, %s61, 0
  %p64 = scmp.lt.s32.totalorder %s63, 0
  %s65 = scalar_select %p64, %s63, 0
  %s66 = smul.addr %s65, 4
  %s67 = scalar_lea.vmem %s0, %s66
  %s68 = sadd.s32 0, 0
  %p69 = scmp.lt.s32.totalorder %s68, 0
  %s70 = scalar_select %p69, %s68, 0
  %p71 = scmp.lt.s32.totalorder %s70, 0
  %s72 = scalar_select %p71, %s70, 0
  %s73 = smul.addr %s72, 4
  %s74 = scalar_lea.vmem %s1, %s73
  %s75 = sadd.s32 0, 0
  %p76 = scmp.lt.s32.totalorder %s75, 0
  %s77 = scalar_select %p76, %s75, 0
  %p78 = scmp.lt.s32.totalorder %s77, 0
  %s79 = scalar_select %p78, %s77, 0
  %s80 = smul.addr %s79, 4
  %s81 = scalar_lea.vmem %s2, %s80
  %s82 = sadd.s32 0, 0
  %p83 = scmp.lt.s32.totalorder %s82, 0
  %s84 = scalar_select %p83, %s82, 0
  %p85 = scmp.lt.s32.totalorder %s84, 0
  %s86 = scalar_select %p85, %s84, 0
  %s87 = smul.addr %s86, 4
  %s88 = scalar_lea.vmem %s3, %s87
  %s89 = sadd.s32 0, 0
  %p90 = scmp.lt.s32.totalorder %s89, 0
  %s91 = scalar_select %p90, %s89, 0
  %p92 = scmp.lt.s32.totalorder %s91, 0
  %s93 = scalar_select %p92, %s91, 0
  %s94 = smul.addr %s93, 4
  %s95 = scalar_lea.vmem %s0, %s94
  %s96 = sadd.s32 0, 0
  %p97 = scmp.lt.s32.totalorder %s96, 0
  %s98 = scalar_select %p97, %s96, 0
  %s99 = sadd.s32 0, 0
  %p100 = scmp.lt.s32.totalorder %s99, 0
  %s101 = scalar_select %p100, %s99, 0
  %p102 = scmp.lt.s32.totalorder %s101, 0
  %s103 = scalar_select %p102, %s101, 0
  %s104 = smul.addr %s103, 4
  %s105 = scalar_lea.vmem %s1, %s104
  %s106 = sadd.s32 0, 0
  %p107 = scmp.lt.s32.totalorder %s106, 0
  %s108 = scalar_select %p107, %s106, 0
  %s109 = sadd.s32 0, 0
  %p110 = scmp.lt.s32.totalorder %s109, 0
  %s111 = scalar_select %p110, %s109, 0
  %p112 = scmp.lt.s32.totalorder %s111, 0
  %s113 = scalar_select %p112, %s111, 0
  %s114 = smul.addr %s113, 4
  %s115 = scalar_lea.vmem %s2, %s114
  %s116 = sadd.s32 0, 0
  %p117 = scmp.lt.s32.totalorder %s116, 0
  %s118 = scalar_select %p117, %s116, 0
  %s119 = sadd.s32 0, 0
  %p120 = scmp.lt.s32.totalorder %s119, 0
  %s121 = scalar_select %p120, %s119, 0
  %p122 = scmp.lt.s32.totalorder %s121, 0
  %s123 = scalar_select %p122, %s121, 0
  %s124 = smul.addr %s123, 4
  %s125 = scalar_lea.vmem %s3, %s124
  %s126 = sadd.s32 0, 0
  %p127 = scmp.lt.s32.totalorder %s126, 0
  %s128 = scalar_select %p127, %s126, 0
  %p129 = scmp.eq.s32.totalorder 0, 0
  // Predicated region
  $region18: #{_saits_loss_impl.1} parent=0 // pred_check
    %p130 = pneg %p129
  $region19: #{_saits_loss_impl.1} parent=0 // pred_check_branch
    %132 = sbr.rel (%p130) target = $region21
  $region20: #{_saits_loss_impl.1} parent=0 // pred_region
    %133 = vst [vmem:[%s4] sm:$0xf] 0.0
    %134 = vst [vmem:[%s5] sm:$0xf] 0.0
    %135 = vst [vmem:[%s6] sm:$0xf] 0.0
    %136 = vst [vmem:[%s7] sm:$0xf] 0.0
  $region21: #{_saits_loss_impl.1} parent=0 // pred_fallthru
    _
  %v137 = vld [vmem:[%s95] sm:$0xf]
  %v138 = vld [vmem:[%s105] sm:$0xf]
  %v139 = vld [vmem:[%s115] sm:$0xf]
  %v140 = vld [vmem:[%s125] sm:$0xf]
  %v141 = vsub.f32 %v137, %v138
  %v142 = vand.u32 2147483647, %v141
  %v143 = vld [vmem:[%s4] sm:$0xf]
  %v144 = vmul.f32 %v142, %v139
  %v145 = vadd.f32 %v143, %v144
  %146 = vst [vmem:[%s4] sm:$0xf] %v145
  %v147 = vld [vmem:[%s5] sm:$0xf]
  %v148 = vadd.f32 %v147, %v139
  %149 = vst [vmem:[%s5] sm:$0xf] %v148
  %v150 = vld [vmem:[%s6] sm:$0xf]
  %v151 = vmul.f32 %v142, %v140
  %v152 = vadd.f32 %v150, %v151
  %153 = vst [vmem:[%s6] sm:$0xf] %v152
  %v154 = vld [vmem:[%s7] sm:$0xf]
  %v155 = vadd.f32 %v154, %v140
  %156 = vst [vmem:[%s7] sm:$0xf] %v155
  // Predicated region
  $region22: #{_saits_loss_impl.1} parent=0 // pred_check
    _
  $region23: #{_saits_loss_impl.1} parent=0 // pred_check_branch
    %158 = sbr.rel (0) target = $region25
  $region24: #{_saits_loss_impl.1} parent=0 // pred_region
    _
  $region25: #{_saits_loss_impl.1} parent=0 // pred_fallthru
    _
  // Predicated region
  $region26: #{_saits_loss_impl.1} parent=0 // pred_check
    _
  $region27: #{_saits_loss_impl.1} parent=0 // pred_check_branch
    %160 = sbr.rel (0) target = $region29
  $region28: #{_saits_loss_impl.1} parent=0 // pred_region
    _
  $region29: #{_saits_loss_impl.1} parent=0 // pred_fallthru
    _
  // Predicated region
  $region30: #{_saits_loss_impl.1} parent=0 // pred_check
    _
  $region31: #{_saits_loss_impl.1} parent=0 // pred_check_branch
    %162 = sbr.rel (0) target = $region33
  $region32: #{_saits_loss_impl.1} parent=0 // pred_region
    _
  $region33: #{_saits_loss_impl.1} parent=0 // pred_fallthru
    _
  // Predicated region
  $region34: #{_saits_loss_impl.1} parent=0 // pred_check
    _
  $region35: #{_saits_loss_impl.1} parent=0 // pred_check_branch
    %164 = sbr.rel (0) target = $region37
  $region36: #{_saits_loss_impl.1} parent=0 // pred_region
    _
  $region37: #{_saits_loss_impl.1} parent=0 // pred_fallthru
    _
  // Predicated region
  $region38: #{_saits_loss_impl.1} parent=0 // pred_check
    _
  $region39: #{_saits_loss_impl.1} parent=0 // pred_check_branch
    %166 = sbr.rel (0) target = $region41
  $region40: #{_saits_loss_impl.1} parent=0 // pred_region
    _
  $region41: #{_saits_loss_impl.1} parent=0 // pred_fallthru
    _
  // Predicated region
  $region42: #{_saits_loss_impl.1} parent=0 // pred_check
    _
  $region43: #{_saits_loss_impl.1} parent=0 // pred_check_branch
    %168 = sbr.rel (0) target = $region45
  $region44: #{_saits_loss_impl.1} parent=0 // pred_region
    _
  $region45: #{_saits_loss_impl.1} parent=0 // pred_fallthru
    _
  // Predicated region
  $region46: #{_saits_loss_impl.1} parent=0 // pred_check
    _
  $region47: #{_saits_loss_impl.1} parent=0 // pred_check_branch
    %170 = sbr.rel (0) target = $region49
  $region48: #{_saits_loss_impl.1} parent=0 // pred_region
    _
  $region49: #{_saits_loss_impl.1} parent=0 // pred_fallthru
    _
  // Predicated region
  $region50: #{_saits_loss_impl.1} parent=0 // pred_check
    _
  $region51: #{_saits_loss_impl.1} parent=0 // pred_check_branch
    %172 = sbr.rel (0) target = $region53
  $region52: #{_saits_loss_impl.1} parent=0 // pred_region
    _
  $region53: #{_saits_loss_impl.1} parent=0 // pred_fallthru
    _

</llo_original>
